<compile_context>
chip_gen: v7x
topology: tpu7x:2x2x1
jax: 0.10.0
libtpu: 0.0.40
codegen_flags: <defaults>
</compile_context>

<pallas_src>
import functools

import jax
import jax.numpy as jnp
from jax.experimental import pallas as pl
from jax.experimental.pallas import tpu as pltpu

_MIB = 1024 * 1024


def _round_up(x, m):
    return ((x + m - 1) // m) * m


def _largest_tile(n_pad, cap, min_blocks=1):
    """Largest multiple of 128 that divides n_pad, is <= cap, and leaves at
    least `min_blocks` grid blocks.  Falls back to n_pad (single block)."""
    best = None
    t = 128
    while t <= min(cap, n_pad):
        if n_pad % t == 0 and (n_pad // t) >= min_blocks:
            best = t
        t += 128
    return best if best is not None else n_pad


def _vmem_budget_bytes():
    """~75% of physical VMEM: ~48 MiB on v7x (64 MiB), ~96 MiB on v5e/v6e."""
    cap = None
    try:
        info = pltpu.get_tpu_info()
        for name in ("vmem_capacity_bytes", "vmem_bytes", "vmem_size_bytes"):
            if hasattr(info, name):
                v = int(getattr(info, name))
                if v > 0:
                    cap = v
                    break
    except Exception:
        cap = None
    if cap is None:
        cap = 64 * _MIB  # conservative: assume v7x-sized VMEM
    return int(min(cap * 3 // 4, 112 * _MIB))


def _vmem_estimate(n_pad, d_pad, tile_m, tile_k, x_resident):
    """Conservative VMEM usage estimate (double-buffering everywhere)."""
    bf16, f32 = 2, 4
    adj = 2 * tile_m * tile_k * bf16
    x = (2 * n_pad * d_pad * bf16) if x_resident else (2 * tile_k * d_pad * bf16)
    acc_io = 2 * 2 * tile_m * d_pad * f32     # acc_in + acc_out buffers
    x_out = 2 * tile_m * d_pad * bf16
    scratch = tile_m * d_pad * f32
    return adj + x + acc_io + x_out + scratch


def _propagate_kernel(adj_ref, x_ref, acc_in_ref, x_out_ref, acc_out_ref,
                      mm_ref, *, tile_k, x_resident):
    """(row_tile, k_tile) step of x_new = adj @ x with fused layer-sum update."""
    k = pl.program_id(1)

    @pl.when(k == 0)
    def _():
        mm_ref[...] = jnp.zeros_like(mm_ref)

    if x_resident:
        start = pl.multiple_of(k * tile_k, tile_k)
        x_blk = x_ref[pl.ds(start, tile_k), :]
    else:
        x_blk = x_ref[...]

    mm_ref[...] += jnp.dot(adj_ref[...], x_blk,
                           preferred_element_type=jnp.float32)

    @pl.when(k == pl.num_programs(1) - 1)
    def _():
        x_out_ref[...] = mm_ref[...].astype(x_out_ref.dtype)
        acc_out_ref[...] = acc_in_ref[...] + mm_ref[...]   # fused layer average sum


def _make_propagate(n_pad, d_pad, tile_m, tile_k, x_resident, vmem_limit):
    grid = (n_pad // tile_m, n_pad // tile_k)
    grid_m = grid[0]

    if x_resident:
        # Whole x lives in VMEM; constant block index => DMA'd once.
        x_spec = pl.BlockSpec((n_pad, d_pad), lambda i, k: (0, 0))
        x_read_bytes = n_pad * d_pad * 2
    else:
        # Streaming fallback (re-streamed once per row tile).
        x_spec = pl.BlockSpec((tile_k, d_pad), lambda i, k: (k, 0))
        x_read_bytes = grid_m * n_pad * d_pad * 2

    cost = pl.CostEstimate(
        flops=2 * n_pad * n_pad * d_pad,
        transcendentals=0,
        bytes_accessed=(n_pad * n_pad * 2          # adj (bf16)
                        + x_read_bytes             # x reads
                        + n_pad * d_pad * 2        # x_out write (bf16)
                        + 2 * n_pad * d_pad * 4),  # acc read + write (f32)
    )

    kernel = functools.partial(_propagate_kernel, tile_k=tile_k,
                               x_resident=x_resident)

    # Note: adj BlockSpec could use pipeline_mode=pl.Buffered(3) if profiling
    # shows exposed DMA at this tile size; default (2) kept here.
    return pl.pallas_call(
        kernel,
        out_shape=(
            jax.ShapeDtypeStruct((n_pad, d_pad), jnp.bfloat16),   # next-layer x
            jax.ShapeDtypeStruct((n_pad, d_pad), jnp.float32),    # layer-sum acc
        ),
        grid_spec=pltpu.PrefetchScalarGridSpec(
            num_scalar_prefetch=0,
            grid=grid,
            in_specs=[
                pl.BlockSpec((tile_m, tile_k), lambda i, k: (i, k)),  # adj block
                x_spec,                                               # x
                pl.BlockSpec((tile_m, d_pad), lambda i, k: (i, 0)),   # acc_in
            ],
            out_specs=(
                pl.BlockSpec((tile_m, d_pad), lambda i, k: (i, 0)),   # x_out
                pl.BlockSpec((tile_m, d_pad), lambda i, k: (i, 0)),   # acc_out
            ),
            scratch_shapes=[pltpu.VMEM((tile_m, d_pad), jnp.float32)],
        ),
        compiler_params=pltpu.CompilerParams(
            dimension_semantics=("parallel", "arbitrary"),
            vmem_limit_bytes=int(vmem_limit),
        ),
        cost_estimate=cost,
        input_output_aliases={2: 1},   # acc_in buffer is reused as acc_out
    )


def build_norm_adj_padded(edge_index_sym, num_nodes, n_pad, dtype=jnp.bfloat16):
    """D^{-1/2} A D^{-1/2} scatter-added straight into a zero-padded
    (n_pad, n_pad) buffer of the kernel dtype (no intermediate f32 N^2 copy).

    `edge_index_sym` must already be symmetrized (as in the PyTorch __init__),
    since the degree is computed from the source row only.
    """
    row, col = edge_index_sym[0], edge_index_sym[1]
    deg = jnp.zeros((num_nodes,), jnp.float32).at[row].add(1.0)
    deg_inv_sqrt = jnp.where(deg > 0, jax.lax.rsqrt(deg), 0.0)
    norm = deg_inv_sqrt[row] * deg_inv_sqrt[col]
    # message flows source(row) -> target(col); 'add' aggregation at target.
    adj = jnp.zeros((n_pad, n_pad), dtype).at[col, row].add(norm.astype(dtype))
    return adj


def lightgcn_forward(edge_index_sym, x0, n_layers):
    """LightGCN forward: mean of [x0, A x0, ..., A^L x0]."""
    N, D = x0.shape

    d_pad = _round_up(D, 128)        # lane-dense MXU output / vector stores
    n_pad = _round_up(N, 128)        # padding decoupled from tile size
    tile_m = _largest_tile(n_pad, 512, min_blocks=2)   # >=2 row blocks (megacore)
    tile_k = _largest_tile(n_pad, 2048)

    budget = _vmem_budget_bytes()
    x_resident = _vmem_estimate(n_pad, d_pad, tile_m, tile_k, True) <= budget

    adj_pad = build_norm_adj_padded(edge_index_sym, N, n_pad, jnp.bfloat16)

    x_bf = jnp.zeros((n_pad, d_pad), jnp.bfloat16).at[:N, :D].set(
        x0.astype(jnp.bfloat16))
    acc = jnp.zeros((n_pad, d_pad), jnp.float32).at[:N, :D].set(
        x0.astype(jnp.float32))          # layer 0 = raw embeddings

    propagate = _make_propagate(n_pad, d_pad, tile_m, tile_k, x_resident, budget)

    for _ in range(n_layers):
        x_bf, acc = propagate(adj_pad, x_bf, acc)

    final = (acc[:N, :D] * (1.0 / float(n_layers + 1))).astype(x0.dtype)
    return final


def xavier_uniform(key, shape, dtype=jnp.float32):
    fan_in, fan_out = shape[0], shape[1]
    bound = (6.0 / (fan_in + fan_out)) ** 0.5
    return jax.random.uniform(key, shape, dtype, -bound, bound)


if __name__ == "__main__":
    num_user, num_item, dim_E, n_layers = 8, 24, 32, 3
    N = num_user + num_item

    key = jax.random.PRNGKey(0)
    ku, ki = jax.random.split(key, 2)
    user_emb = xavier_uniform(ku, (num_user, dim_E))
    item_emb = xavier_uniform(ki, (num_item, dim_E))
    x0 = jnp.concatenate([user_emb, item_emb], axis=0)          # (N, D)

    # Deterministic bipartite user-item edges (item ids offset by num_user),
    # symmetrized exactly as the PyTorch __init__ does.
    edges = []
    for u in range(num_user):
        for k in range(3):
            it = (u * 3 + k) % num_item
            edges.append((u, num_user + it))
    ei = jnp.asarray(edges, dtype=jnp.int32).T                  # (2, E)
    ei_sym = jnp.concatenate([ei, ei[::-1]], axis=1)            # (2, 2E)

    fwd = jax.jit(functools.partial(lightgcn_forward, n_layers=n_layers))
    out = jax.block_until_ready(fwd(ei_sym, x0))

    # Reference 1: bf16-matched arithmetic (mirrors the kernel's casts:
    # bf16 adj/x, f32 matmul + layer-sum accumulation, bf16 between layers).
    adj_bf = build_norm_adj_padded(ei_sym, N, N, jnp.bfloat16)
    xb = x0.astype(jnp.bfloat16)
    accr = x0.astype(jnp.float32)
    for _ in range(n_layers):
        xf32 = jnp.dot(adj_bf, xb, preferred_element_type=jnp.float32)
        accr = accr + xf32
        xb = xf32.astype(jnp.bfloat16)
    ref_bf16 = (accr / float(n_layers + 1)).astype(x0.dtype)
    assert jnp.allclose(out, ref_bf16, atol=1e-3, rtol=1e-3), \
        "mismatch vs bf16-matched reference"

    # Reference 2: full f32 semantics of the PyTorch module (looser tolerance
    # covers the bf16 quantization of adj / inter-layer x).
    row, col = ei_sym[0], ei_sym[1]
    deg = jnp.zeros((N,), jnp.float32).at[row].add(1.0)
    dis = deg ** -0.5
    adj_f32 = jnp.zeros((N, N), jnp.float32).at[col, row].add(dis[row] * dis[col])
    xf = x0
    accf = x0
    for _ in range(n_layers):
        xf = adj_f32 @ xf
        accf = accf + xf
    ref_f32 = accf / float(n_layers + 1)
    assert jnp.allclose(out, ref_f32, atol=2e-2, rtol=2e-2), \
        "mismatch vs f32 reference"

    print("KERNEL_OK")
</pallas_src>

<mosaic_0001>
module attributes {stable_mosaic.version = 11 : i64} {
  func.func private @main(%arg0: i32) attributes {dimension_semantics = [#tpu.dimension_semantics<core_parallel>], iteration_bounds = array<i64: 2>, tpu.core_type = #tpu.core_type<sc_scalar_subcore>, window_params = []} {
    return
  }
}

module attributes {stable_mosaic.version = 11 : i64} {
  func.func private @main(%arg0: i32) attributes {dimension_semantics = [#tpu.dimension_semantics<core_parallel>], iteration_bounds = array<i64: 2>, tpu.core_type = #tpu.core_type<sc_scalar_subcore>, window_params = []} {
    return
  }
}

module attributes {stable_mosaic.version = 11 : i64} {
  func.func @_propagate_kernel(%arg0: i32, %arg1: i32, %arg2: memref<128x128xbf16, #tpu.memory_space<vmem>>, %arg3: memref<128x128xbf16, #tpu.memory_space<vmem>>, %arg4: memref<128x128xf32, #tpu.memory_space<vmem>>, %arg5: memref<128x128xbf16, #tpu.memory_space<vmem>>, %arg6: memref<128x128xf32, #tpu.memory_space<vmem>>, %arg7: memref<128x128xf32, #tpu.memory_space<vmem>>) attributes {dimension_semantics = [#tpu.dimension_semantics<parallel>, #tpu.dimension_semantics<arbitrary>], iteration_bounds = array<i64: 1, 1>, scalar_prefetch = 0 : i64, scratch_operands = 1 : i64, tpu.core_type = #tpu.core_type<tc>, window_params = [{transform_indices = @transform_0, window_bounds = array<i64: 128, 128>}, {pipeline_mode = #tpu.pipeline_mode<synchronous>, transform_indices = @transform_1, window_bounds = array<i64: 128, 128>}, {transform_indices = @transform_2, window_bounds = array<i64: 128, 128>}, {transform_indices = @transform_3, window_bounds = array<i64: 128, 128>}, {transform_indices = @transform_4, window_bounds = array<i64: 128, 128>}]} {
    %c0_i32 = arith.constant 0 : i32
    %0 = arith.cmpi eq, %arg1, %c0_i32 : i32
    %1 = arith.extui %0 : i1 to i32
    %c0_i32_0 = arith.constant 0 : i32
    %2 = arith.cmpi ne, %1, %c0_i32_0 : i32
    scf.if %2 {
      %cst_9 = arith.constant 0.000000e+00 : f32
      %15 = vector.broadcast %cst_9 : f32 to vector<128x128xf32>
      %c0_10 = arith.constant 0 : index
      %c0_11 = arith.constant 0 : index
      %16 = vector.load %arg7[%c0_10, %c0_11] : memref<128x128xf32, #tpu.memory_space<vmem>>, vector<128x128xf32>
      tpu.vector_store %arg7[%c0_10, %c0_11], %15 {strides = array<i32>} : memref<128x128xf32, #tpu.memory_space<vmem>>, vector<128x128xf32>,
    } else {
    }
    %c128_i32 = arith.constant 128 : i32
    %3 = arith.muli %arg1, %c128_i32 : i32
    %4 = tpu.assume_multiple %3, 128 : i32
    %5 = arith.index_cast %4 : i32 to index
    %c0 = arith.constant 0 : index
    %6 = vector.load %arg3[%5, %c0] : memref<128x128xbf16, #tpu.memory_space<vmem>>, vector<128x128xbf16>
    %c0_1 = arith.constant 0 : index
    %c0_2 = arith.constant 0 : index
    %7 = vector.load %arg7[%c0_1, %c0_2] : memref<128x128xf32, #tpu.memory_space<vmem>>, vector<128x128xf32>
    %c0_3 = arith.constant 0 : index
    %c0_4 = arith.constant 0 : index
    %8 = vector.load %arg2[%c0_3, %c0_4] : memref<128x128xbf16, #tpu.memory_space<vmem>>, vector<128x128xbf16>
    %cst = arith.constant dense<0.000000e+00> : vector<128x128xf32>
    %9 = tpu.matmul %8, %6, %cst {dimension_numbers = #tpu.dot_dimension_numbers<[1], [0], [0], [1], [0, 0, 1, 1], [], []>} : vector<128x128xbf16>, vector<128x128xbf16>, vector<128x128xf32> -> vector<128x128xf32>
    %10 = arith.addf %7, %9 : vector<128x128xf32>
    %c0_5 = arith.constant 0 : index
    %c0_6 = arith.constant 0 : index
    %11 = vector.load %arg7[%c0_5, %c0_6] : memref<128x128xf32, #tpu.memory_space<vmem>>, vector<128x128xf32>
    tpu.vector_store %arg7[%c0_5, %c0_6], %10 {strides = array<i32>} : memref<128x128xf32, #tpu.memory_space<vmem>>, vector<128x128xf32>,
    %c0_i32_7 = arith.constant 0 : i32
    %12 = arith.cmpi eq, %arg1, %c0_i32_7 : i32
    %13 = arith.extui %12 : i1 to i32
    %c0_i32_8 = arith.constant 0 : i32
    %14 = arith.cmpi ne, %13, %c0_i32_8 : i32
    scf.if %14 {
      %c0_9 = arith.constant 0 : index
      %c0_10 = arith.constant 0 : index
      %15 = vector.load %arg7[%c0_9, %c0_10] : memref<128x128xf32, #tpu.memory_space<vmem>>, vector<128x128xf32>
      %16 = arith.truncf %15 : vector<128x128xf32> to vector<128x128xbf16>
      %c0_11 = arith.constant 0 : index
      %c0_12 = arith.constant 0 : index
      %17 = vector.load %arg5[%c0_11, %c0_12] : memref<128x128xbf16, #tpu.memory_space<vmem>>, vector<128x128xbf16>
      tpu.vector_store %arg5[%c0_11, %c0_12], %16 {strides = array<i32>} : memref<128x128xbf16, #tpu.memory_space<vmem>>, vector<128x128xbf16>,
      %c0_13 = arith.constant 0 : index
      %c0_14 = arith.constant 0 : index
      %18 = vector.load %arg4[%c0_13, %c0_14] : memref<128x128xf32, #tpu.memory_space<vmem>>, vector<128x128xf32>
      %c0_15 = arith.constant 0 : index
      %c0_16 = arith.constant 0 : index
      %19 = vector.load %arg7[%c0_15, %c0_16] : memref<128x128xf32, #tpu.memory_space<vmem>>, vector<128x128xf32>
      %20 = arith.addf %18, %19 : vector<128x128xf32>
      %c0_17 = arith.constant 0 : index
      %c0_18 = arith.constant 0 : index
      %21 = vector.load %arg6[%c0_17, %c0_18] : memref<128x128xf32, #tpu.memory_space<vmem>>, vector<128x128xf32>
      tpu.vector_store %arg6[%c0_17, %c0_18], %20 {strides = array<i32>} : memref<128x128xf32, #tpu.memory_space<vmem>>, vector<128x128xf32>,
    } else {
    }
    return
  }
  func.func @transform_0(%arg0: i32, %arg1: i32) -> (i32, i32) {
    %c0_i32 = arith.constant 0 : i32
    return %arg0, %arg1 : i32, i32
  }
  func.func @transform_1(%arg0: i32, %arg1: i32) -> (i32, i32) {
    %c0_i32 = arith.constant 0 : i32
    %c0_i32_0 = arith.constant 0 : i32
    %c0_i32_1 = arith.constant 0 : i32
    return %c0_i32, %c0_i32_0 : i32, i32
  }
  func.func @transform_2(%arg0: i32, %arg1: i32) -> (i32, i32) {
    %c0_i32 = arith.constant 0 : i32
    %c0_i32_0 = arith.constant 0 : i32
    return %arg0, %c0_i32 : i32, i32
  }
  func.func @transform_3(%arg0: i32, %arg1: i32) -> (i32, i32) {
    %c0_i32 = arith.constant 0 : i32
    %c0_i32_0 = arith.constant 0 : i32
    return %arg0, %c0_i32 : i32, i32
  }
  func.func @transform_4(%arg0: i32, %arg1: i32) -> (i32, i32) {
    %c0_i32 = arith.constant 0 : i32
    %c0_i32_0 = arith.constant 0 : i32
    return %arg0, %c0_i32 : i32, i32
  }
}

module attributes {stable_mosaic.version = 11 : i64} {
  func.func @_propagate_kernel(%arg0: i32, %arg1: i32, %arg2: memref<128x128xbf16, #tpu.memory_space<vmem>>, %arg3: memref<128x128xbf16, #tpu.memory_space<vmem>>, %arg4: memref<128x128xf32, #tpu.memory_space<vmem>>, %arg5: memref<128x128xbf16, #tpu.memory_space<vmem>>, %arg6: memref<128x128xf32, #tpu.memory_space<vmem>>, %arg7: memref<128x128xf32, #tpu.memory_space<vmem>>) attributes {dimension_semantics = [#tpu.dimension_semantics<parallel>, #tpu.dimension_semantics<arbitrary>], iteration_bounds = array<i64: 1, 1>, scalar_prefetch = 0 : i64, scratch_operands = 1 : i64, tpu.core_type = #tpu.core_type<tc>, window_params = [{transform_indices = @transform_0, window_bounds = array<i64: 128, 128>}, {pipeline_mode = #tpu.pipeline_mode<synchronous>, transform_indices = @transform_1, window_bounds = array<i64: 128, 128>}, {transform_indices = @transform_2, window_bounds = array<i64: 128, 128>}, {transform_indices = @transform_3, window_bounds = array<i64: 128, 128>}, {transform_indices = @transform_4, window_bounds = array<i64: 128, 128>}]} {
    %c0_i32 = arith.constant 0 : i32
    %0 = arith.cmpi eq, %arg1, %c0_i32 : i32
    %1 = arith.extui %0 : i1 to i32
    %c0_i32_0 = arith.constant 0 : i32
    %2 = arith.cmpi ne, %1, %c0_i32_0 : i32
    scf.if %2 {
      %cst_9 = arith.constant 0.000000e+00 : f32
      %15 = vector.broadcast %cst_9 : f32 to vector<128x128xf32>
      %c0_10 = arith.constant 0 : index
      %c0_11 = arith.constant 0 : index
      %16 = vector.load %arg7[%c0_10, %c0_11] : memref<128x128xf32, #tpu.memory_space<vmem>>, vector<128x128xf32>
      tpu.vector_store %arg7[%c0_10, %c0_11], %15 {strides = array<i32>} : memref<128x128xf32, #tpu.memory_space<vmem>>, vector<128x128xf32>,
    } else {
    }
    %c128_i32 = arith.constant 128 : i32
    %3 = arith.muli %arg1, %c128_i32 : i32
    %4 = tpu.assume_multiple %3, 128 : i32
    %5 = arith.index_cast %4 : i32 to index
    %c0 = arith.constant 0 : index
    %6 = vector.load %arg3[%5, %c0] : memref<128x128xbf16, #tpu.memory_space<vmem>>, vector<128x128xbf16>
    %c0_1 = arith.constant 0 : index
    %c0_2 = arith.constant 0 : index
    %7 = vector.load %arg7[%c0_1, %c0_2] : memref<128x128xf32, #tpu.memory_space<vmem>>, vector<128x128xf32>
    %c0_3 = arith.constant 0 : index
    %c0_4 = arith.constant 0 : index
    %8 = vector.load %arg2[%c0_3, %c0_4] : memref<128x128xbf16, #tpu.memory_space<vmem>>, vector<128x128xbf16>
    %cst = arith.constant dense<0.000000e+00> : vector<128x128xf32>
    %9 = tpu.matmul %8, %6, %cst {dimension_numbers = #tpu.dot_dimension_numbers<[1], [0], [0], [1], [0, 0, 1, 1], [], []>} : vector<128x128xbf16>, vector<128x128xbf16>, vector<128x128xf32> -> vector<128x128xf32>
    %10 = arith.addf %7, %9 : vector<128x128xf32>
    %c0_5 = arith.constant 0 : index
    %c0_6 = arith.constant 0 : index
    %11 = vector.load %arg7[%c0_5, %c0_6] : memref<128x128xf32, #tpu.memory_space<vmem>>, vector<128x128xf32>
    tpu.vector_store %arg7[%c0_5, %c0_6], %10 {strides = array<i32>} : memref<128x128xf32, #tpu.memory_space<vmem>>, vector<128x128xf32>,
    %c0_i32_7 = arith.constant 0 : i32
    %12 = arith.cmpi eq, %arg1, %c0_i32_7 : i32
    %13 = arith.extui %12 : i1 to i32
    %c0_i32_8 = arith.constant 0 : i32
    %14 = arith.cmpi ne, %13, %c0_i32_8 : i32
    scf.if %14 {
      %c0_9 = arith.constant 0 : index
      %c0_10 = arith.constant 0 : index
      %15 = vector.load %arg7[%c0_9, %c0_10] : memref<128x128xf32, #tpu.memory_space<vmem>>, vector<128x128xf32>
      %16 = arith.truncf %15 : vector<128x128xf32> to vector<128x128xbf16>
      %c0_11 = arith.constant 0 : index
      %c0_12 = arith.constant 0 : index
      %17 = vector.load %arg5[%c0_11, %c0_12] : memref<128x128xbf16, #tpu.memory_space<vmem>>, vector<128x128xbf16>
      tpu.vector_store %arg5[%c0_11, %c0_12], %16 {strides = array<i32>} : memref<128x128xbf16, #tpu.memory_space<vmem>>, vector<128x128xbf16>,
      %c0_13 = arith.constant 0 : index
      %c0_14 = arith.constant 0 : index
      %18 = vector.load %arg4[%c0_13, %c0_14] : memref<128x128xf32, #tpu.memory_space<vmem>>, vector<128x128xf32>
      %c0_15 = arith.constant 0 : index
      %c0_16 = arith.constant 0 : index
      %19 = vector.load %arg7[%c0_15, %c0_16] : memref<128x128xf32, #tpu.memory_space<vmem>>, vector<128x128xf32>
      %20 = arith.addf %18, %19 : vector<128x128xf32>
      %c0_17 = arith.constant 0 : index
      %c0_18 = arith.constant 0 : index
      %21 = vector.load %arg6[%c0_17, %c0_18] : memref<128x128xf32, #tpu.memory_space<vmem>>, vector<128x128xf32>
      tpu.vector_store %arg6[%c0_17, %c0_18], %20 {strides = array<i32>} : memref<128x128xf32, #tpu.memory_space<vmem>>, vector<128x128xf32>,
    } else {
    }
    return
  }
  func.func @transform_0(%arg0: i32, %arg1: i32) -> (i32, i32) {
    %c0_i32 = arith.constant 0 : i32
    return %arg0, %arg1 : i32, i32
  }
  func.func @transform_1(%arg0: i32, %arg1: i32) -> (i32, i32) {
    %c0_i32 = arith.constant 0 : i32
    %c0_i32_0 = arith.constant 0 : i32
    %c0_i32_1 = arith.constant 0 : i32
    return %c0_i32, %c0_i32_0 : i32, i32
  }
  func.func @transform_2(%arg0: i32, %arg1: i32) -> (i32, i32) {
    %c0_i32 = arith.constant 0 : i32
    %c0_i32_0 = arith.constant 0 : i32
    return %arg0, %c0_i32 : i32, i32
  }
  func.func @transform_3(%arg0: i32, %arg1: i32) -> (i32, i32) {
    %c0_i32 = arith.constant 0 : i32
    %c0_i32_0 = arith.constant 0 : i32
    return %arg0, %c0_i32 : i32, i32
  }
  func.func @transform_4(%arg0: i32, %arg1: i32) -> (i32, i32) {
    %c0_i32 = arith.constant 0 : i32
    %c0_i32_0 = arith.constant 0 : i32
    return %arg0, %c0_i32 : i32, i32
  }
}

</mosaic_0001>

<llo_original>
// kernel: lightgcn_forward.3
$region0: #{lightgcn_forward.3}
  #allocation0 [shape = 'u32[]', space=smem, size = 0x4, offset = 0x4, fixed_abs, tag = 'smem constant byte address 0x4 - core index']
  #allocation1 [shape = 'u32[144,128]{1,0:T(1,128)}', space=vmem, size = 0x12000, scoped, tag = 'internal scratch']
  #allocation2 [shape = 'f32[128,128]{1,0:T(8,128)}', space=vmem, size = 0x10000, scoped, tag = 'scratch operand']
  %s0 = inlined_call_operand.vmem [shape: bf16[128,128], index: 0, kind: input, shape index: {}]
  %s1 = inlined_call_operand.vmem [shape: bf16[128,128], index: 1, kind: input, shape index: {}]
  %s2 = inlined_call_operand.vmem [shape: f32[128,128], index: 2, kind: input, shape index: {}, may-alias: {2,4}]
  %s3 = inlined_call_operand.vmem [shape: bf16[128,128], index: 3, kind: output, shape index: {0}]
  %s4 = inlined_call_operand.vmem [shape: f32[128,128], index: 4, kind: output, shape index: {1}, may-alias: {2,4}]
  %5 = xla_tuple %s3, %s4
  %s6 = sld [smem:[#allocation0]]
  $region38: #{lightgcn_forward.3} parent=0
    _
  %s8 = ssub.s32 1, %s6
  %s9 = scalar_select 0, %s8, %s6
  // Predicated region
  $region2: #{lightgcn_forward.3} parent=0 // pred_check
    _
  $region3: #{lightgcn_forward.3} parent=0 // pred_check_branch
    %11 = sbr.rel (0) target = $region5
  $region4: #{lightgcn_forward.3} parent=0 // pred_region
    _
  $region5: #{lightgcn_forward.3} parent=0 // pred_fallthru
    _
  // Predicated region
  $region6: #{lightgcn_forward.3} parent=0 // pred_check
    _
  $region7: #{lightgcn_forward.3} parent=0 // pred_check_branch
    %13 = sbr.rel (0) target = $region9
  $region8: #{lightgcn_forward.3} parent=0 // pred_region
    _
  $region9: #{lightgcn_forward.3} parent=0 // pred_fallthru
    _
  // Predicated region
  $region10: #{lightgcn_forward.3} parent=0 // pred_check
    _
  $region11: #{lightgcn_forward.3} parent=0 // pred_check_branch
    %15 = sbr.rel (0) target = $region13
  $region12: #{lightgcn_forward.3} parent=0 // pred_region
    _
  $region13: #{lightgcn_forward.3} parent=0 // pred_fallthru
    _
  %p17 = scmp.eq.s32.totalorder 0, 0
  // Predicated region
  $region14: #{lightgcn_forward.3} parent=0 // pred_check
    %p18 = pneg %p17
  $region15: #{lightgcn_forward.3} parent=0 // pred_check_branch
    %20 = sbr.rel (%p18) target = $region17
  $region16: #{lightgcn_forward.3} parent=0 // pred_region
    %21 = vst [vmem:[#allocation2] sm:$0xff] 0.0
    %22 = vst [vmem:[#allocation2 + $0x8] sm:$0xff] 0.0
    %23 = vst [vmem:[#allocation2 + $0x10] sm:$0xff] 0.0
    %24 = vst [vmem:[#allocation2 + $0x18] sm:$0xff] 0.0
    %25 = vst [vmem:[#allocation2 + $0x20] sm:$0xff] 0.0
    %26 = vst [vmem:[#allocation2 + $0x28] sm:$0xff] 0.0
    %27 = vst [vmem:[#allocation2 + $0x30] sm:$0xff] 0.0
    %28 = vst [vmem:[#allocation2 + $0x38] sm:$0xff] 0.0
    %29 = vst [vmem:[#allocation2 + $0x40] sm:$0xff] 0.0
    %30 = vst [vmem:[#allocation2 + $0x48] sm:$0xff] 0.0
    %31 = vst [vmem:[#allocation2 + $0x50] sm:$0xff] 0.0
    %32 = vst [vmem:[#allocation2 + $0x58] sm:$0xff] 0.0
    %33 = vst [vmem:[#allocation2 + $0x60] sm:$0xff] 0.0
    %34 = vst [vmem:[#allocation2 + $0x68] sm:$0xff] 0.0
    %35 = vst [vmem:[#allocation2 + $0x70] sm:$0xff] 0.0
    %36 = vst [vmem:[#allocation2 + $0x78] sm:$0xff] 0.0
  $region17: #{lightgcn_forward.3} parent=0 // pred_fallthru
    _
  %s37 = smul.u32 0, 128
  %s38 = sshra.s32 %s37, 3
  %s39 = sand.u32 %s37, 7
  %s40 = smul.addr %s38, 4
  %s41 = scalar_lea.vmem %s1, %s40
  %v42 = vld [vmem:[%s41] sm:$0xf]
  %v43 = vld [vmem:[%s41 + $0x4] sm:$0xf]
  %v44 = vld [vmem:[%s41 + $0x8] sm:$0xf]
  %v45 = vld [vmem:[%s41 + $0xc] sm:$0xf]
  %v46 = vld [vmem:[%s41 + $0x10] sm:$0xf]
  %v47 = vld [vmem:[%s41 + $0x14] sm:$0xf]
  %v48 = vld [vmem:[%s41 + $0x18] sm:$0xf]
  %v49 = vld [vmem:[%s41 + $0x1c] sm:$0xf]
  %v50 = vld [vmem:[%s41 + $0x20] sm:$0xf]
  %v51 = vld [vmem:[%s41 + $0x24] sm:$0xf]
  %v52 = vld [vmem:[%s41 + $0x28] sm:$0xf]
  %v53 = vld [vmem:[%s41 + $0x2c] sm:$0xf]
  %v54 = vld [vmem:[%s41 + $0x30] sm:$0xf]
  %v55 = vld [vmem:[%s41 + $0x34] sm:$0xf]
  %v56 = vld [vmem:[%s41 + $0x38] sm:$0xf]
  %v57 = vld [vmem:[%s41 + $0x3c] sm:$0xf]
  %v58 = vld [vmem:[#allocation2] sm:$0xff]
  %v59 = vld [vmem:[#allocation2 + $0x8] sm:$0xff]
  %v60 = vld [vmem:[#allocation2 + $0x10] sm:$0xff]
  %v61 = vld [vmem:[#allocation2 + $0x18] sm:$0xff]
  %v62 = vld [vmem:[#allocation2 + $0x20] sm:$0xff]
  %v63 = vld [vmem:[#allocation2 + $0x28] sm:$0xff]
  %v64 = vld [vmem:[#allocation2 + $0x30] sm:$0xff]
  %v65 = vld [vmem:[#allocation2 + $0x38] sm:$0xff]
  %v66 = vld [vmem:[#allocation2 + $0x40] sm:$0xff]
  %v67 = vld [vmem:[#allocation2 + $0x48] sm:$0xff]
  %v68 = vld [vmem:[#allocation2 + $0x50] sm:$0xff]
  %v69 = vld [vmem:[#allocation2 + $0x58] sm:$0xff]
  %v70 = vld [vmem:[#allocation2 + $0x60] sm:$0xff]
  %v71 = vld [vmem:[#allocation2 + $0x68] sm:$0xff]
  %v72 = vld [vmem:[#allocation2 + $0x70] sm:$0xff]
  %v73 = vld [vmem:[#allocation2 + $0x78] sm:$0xff]
  %v74 = vld [vmem:[%s0] sm:$0xf]
  %v75 = vld [vmem:[%s0 + $0x4] sm:$0xf]
  %v76 = vld [vmem:[%s0 + $0x8] sm:$0xf]
  %v77 = vld [vmem:[%s0 + $0xc] sm:$0xf]
  %v78 = vld [vmem:[%s0 + $0x10] sm:$0xf]
  %v79 = vld [vmem:[%s0 + $0x14] sm:$0xf]
  %v80 = vld [vmem:[%s0 + $0x18] sm:$0xf]
  %v81 = vld [vmem:[%s0 + $0x1c] sm:$0xf]
  %v82 = vld [vmem:[%s0 + $0x20] sm:$0xf]
  %v83 = vld [vmem:[%s0 + $0x24] sm:$0xf]
  %v84 = vld [vmem:[%s0 + $0x28] sm:$0xf]
  %v85 = vld [vmem:[%s0 + $0x2c] sm:$0xf]
  %v86 = vld [vmem:[%s0 + $0x30] sm:$0xf]
  %v87 = vld [vmem:[%s0 + $0x34] sm:$0xf]
  %v88 = vld [vmem:[%s0 + $0x38] sm:$0xf]
  %v89 = vld [vmem:[%s0 + $0x3c] sm:$0xf]
  %v106 = vunpack.c.l.b16 %v74
  %v107 = vunpack.c.l.b16 %v75
  %v108 = vunpack.c.l.b16 %v76
  %v109 = vunpack.c.l.b16 %v77
  %v110 = vunpack.c.l.b16 %v78
  %v111 = vunpack.c.l.b16 %v79
  %v112 = vunpack.c.l.b16 %v80
  %v113 = vunpack.c.l.b16 %v81
  %v114 = vunpack.c.l.b16 %v82
  %v115 = vunpack.c.l.b16 %v83
  %v116 = vunpack.c.l.b16 %v84
  %v117 = vunpack.c.l.b16 %v85
  %v118 = vunpack.c.l.b16 %v86
  %v119 = vunpack.c.l.b16 %v87
  %v120 = vunpack.c.l.b16 %v88
  %v121 = vunpack.c.l.b16 %v89
  %v122 = vpack.c.b16 %v107, %v106
  %v123 = vpack.c.b16 %v109, %v108
  %v124 = vpack.c.b16 %v111, %v110
  %v125 = vpack.c.b16 %v113, %v112
  %v126 = vpack.c.b16 %v115, %v114
  %v127 = vpack.c.b16 %v117, %v116
  %v128 = vpack.c.b16 %v119, %v118
  %v129 = vpack.c.b16 %v121, %v120
  %v154 = vunpack.c.l.b16 %v42
  %v155 = vunpack.c.l.b16 %v43
  %v156 = vunpack.c.l.b16 %v44
  %v157 = vunpack.c.l.b16 %v45
  %v158 = vunpack.c.l.b16 %v46
  %v159 = vunpack.c.l.b16 %v47
  %v160 = vunpack.c.l.b16 %v48
  %v161 = vunpack.c.l.b16 %v49
  %v162 = vunpack.c.l.b16 %v50
  %v163 = vunpack.c.l.b16 %v51
  %v164 = vunpack.c.l.b16 %v52
  %v165 = vunpack.c.l.b16 %v53
  %v166 = vunpack.c.l.b16 %v54
  %v167 = vunpack.c.l.b16 %v55
  %v168 = vunpack.c.l.b16 %v56
  %v169 = vunpack.c.l.b16 %v57
  %v170 = vpack.c.b16 %v155, %v154
  %v171 = vpack.c.b16 %v157, %v156
  %v172 = vpack.c.b16 %v159, %v158
  %v173 = vpack.c.b16 %v161, %v160
  %v174 = vpack.c.b16 %v163, %v162
  %v175 = vpack.c.b16 %v165, %v164
  %v176 = vpack.c.b16 %v167, %v166
  %v177 = vpack.c.b16 %v169, %v168
  %186 = vmatprep.subr.bf16.mxu0 0
  %187 = vmatpush1.bf16.msra.mxu0 %v170
  %188 = vmatprep.subr.bf16.mxu0 0
  %189 = vmatpush1.bf16.msra.mxu0 %v171
  %190 = vmatprep.subr.bf16.mxu0 0
  %191 = vmatpush1.bf16.msra.mxu0 %v172
  %192 = vmatprep.subr.bf16.mxu0 0
  %193 = vmatpush1.bf16.msra.mxu0 %v173
  %194 = vmatprep.subr.bf16.mxu0 0
  %195 = vmatpush1.bf16.msra.mxu0 %v174
  %196 = vmatprep.subr.bf16.mxu0 0
  %197 = vmatpush1.bf16.msra.mxu0 %v175
  %198 = vmatprep.subr.bf16.mxu0 0
  %199 = vmatpush1.bf16.msra.mxu0 %v176
  %200 = vmatprep.subr.bf16.mxu0 0
  %201 = vmatpush1.bf16.msra.mxu0 %v177
  %202 = vmatprep.subr.bf16.mxu0 0
  %203 = vmatpush1.bf16.msra.mxu0 0
  %204 = vmatprep.subr.bf16.mxu0 0
  %205 = vmatpush1.bf16.msra.mxu0 0
  %206 = vmatprep.subr.bf16.mxu0 0
  %207 = vmatpush1.bf16.msra.mxu0 0
  %208 = vmatprep.subr.bf16.mxu0 0
  %209 = vmatpush1.bf16.msra.mxu0 0
  %210 = vmatprep.subr.bf16.mxu0 0
  %211 = vmatpush1.bf16.msra.mxu0 0
  %212 = vmatprep.subr.bf16.mxu0 0
  %213 = vmatpush1.bf16.msra.mxu0 0
  %214 = vmatprep.subr.bf16.mxu0 0
  %215 = vmatpush1.bf16.msra.mxu0 0
  %216 = vmatprep.subr.bf16.mxu0 0
  %217 = vmatpush1.bf16.msra.mxu0 0
  %218 = vmatprep.mubr.bf16.mxu0 0
  %219 = vmatmul.mubr.bf16.gmra.mrb[0].mxu0 %v122
  %v220 = vpop.f32.mrb[0].mxu0
  %v221 = vadd.f32 0.0, %v220
  %v222 = vpop.f32.mrb[0].mxu0
  %v223 = vpop.f32.mrb[0].mxu0
  %v224 = vadd.f32 0.0, %v223
  %v225 = vpop.f32.mrb[0].mxu0
  %226 = vmatprep.mubr.bf16.mxu0 0
  %227 = vmatmul.mubr.bf16.gmra.mrb[0].mxu0 %v123
  %v228 = vpop.f32.mrb[0].mxu0
  %v229 = vadd.f32 0.0, %v228
  %v230 = vpop.f32.mrb[0].mxu0
  %v231 = vpop.f32.mrb[0].mxu0
  %v232 = vadd.f32 0.0, %v231
  %v233 = vpop.f32.mrb[0].mxu0
  %234 = vmatprep.mubr.bf16.mxu0 0
  %235 = vmatmul.mubr.bf16.gmra.mrb[0].mxu0 %v124
  %v236 = vpop.f32.mrb[0].mxu0
  %v237 = vadd.f32 0.0, %v236
  %v238 = vpop.f32.mrb[0].mxu0
  %v239 = vpop.f32.mrb[0].mxu0
  %v240 = vadd.f32 0.0, %v239
  %v241 = vpop.f32.mrb[0].mxu0
  %242 = vmatprep.mubr.bf16.mxu0 0
  %243 = vmatmul.mubr.bf16.gmra.mrb[0].mxu0 %v125
  %v244 = vpop.f32.mrb[0].mxu0
  %v245 = vadd.f32 0.0, %v244
  %v246 = vpop.f32.mrb[0].mxu0
  %v247 = vpop.f32.mrb[0].mxu0
  %v248 = vadd.f32 0.0, %v247
  %v249 = vpop.f32.mrb[0].mxu0
  %250 = vmatprep.mubr.bf16.mxu0 0
  %251 = vmatmul.mubr.bf16.gmra.mrb[0].mxu0 %v126
  %v252 = vpop.f32.mrb[0].mxu0
  %v253 = vadd.f32 0.0, %v252
  %v254 = vpop.f32.mrb[0].mxu0
  %v255 = vpop.f32.mrb[0].mxu0
  %v256 = vadd.f32 0.0, %v255
  %v257 = vpop.f32.mrb[0].mxu0
  %258 = vmatprep.mubr.bf16.mxu0 0
  %259 = vmatmul.mubr.bf16.gmra.mrb[0].mxu0 %v127
  %v260 = vpop.f32.mrb[0].mxu0
  %v261 = vadd.f32 0.0, %v260
  %v262 = vpop.f32.mrb[0].mxu0
  %v263 = vpop.f32.mrb[0].mxu0
  %v264 = vadd.f32 0.0, %v263
  %v265 = vpop.f32.mrb[0].mxu0
  %266 = vmatprep.mubr.bf16.mxu0 0
  %267 = vmatmul.mubr.bf16.gmra.mrb[0].mxu0 %v128
  %v268 = vpop.f32.mrb[0].mxu0
  %v269 = vadd.f32 0.0, %v268
  %v270 = vpop.f32.mrb[0].mxu0
  %v271 = vpop.f32.mrb[0].mxu0
  %v272 = vadd.f32 0.0, %v271
  %v273 = vpop.f32.mrb[0].mxu0
  %274 = vmatprep.mubr.bf16.mxu0 0
  %275 = vmatmul.mubr.bf16.gmra.mrb[0].mxu0 %v129
  %v276 = vpop.f32.mrb[0].mxu0
  %v277 = vadd.f32 0.0, %v276
  %v278 = vpop.f32.mrb[0].mxu0
  %v279 = vpop.f32.mrb[0].mxu0
  %v280 = vadd.f32 0.0, %v279
  %v281 = vpop.f32.mrb[0].mxu0
  %282 = vdwg.mxu0
  %v283 = vadd.f32 %v58, %v221
  %v284 = vadd.f32 %v59, %v224
  %v285 = vadd.f32 %v60, %v229
  %v286 = vadd.f32 %v61, %v232
  %v287 = vadd.f32 %v62, %v237
  %v288 = vadd.f32 %v63, %v240
  %v289 = vadd.f32 %v64, %v245
  %v290 = vadd.f32 %v65, %v248
  %v291 = vadd.f32 %v66, %v253
  %v292 = vadd.f32 %v67, %v256
  %v293 = vadd.f32 %v68, %v261
  %v294 = vadd.f32 %v69, %v264
  %v295 = vadd.f32 %v70, %v269
  %v296 = vadd.f32 %v71, %v272
  %v297 = vadd.f32 %v72, %v277
  %v298 = vadd.f32 %v73, %v280
  %299 = vst [vmem:[#allocation2] sm:$0xff] %v283
  %300 = vst [vmem:[#allocation2 + $0x8] sm:$0xff] %v284
  %301 = vst [vmem:[#allocation2 + $0x10] sm:$0xff] %v285
  %302 = vst [vmem:[#allocation2 + $0x18] sm:$0xff] %v286
  %303 = vst [vmem:[#allocation2 + $0x20] sm:$0xff] %v287
  %304 = vst [vmem:[#allocation2 + $0x28] sm:$0xff] %v288
  %305 = vst [vmem:[#allocation2 + $0x30] sm:$0xff] %v289
  %306 = vst [vmem:[#allocation2 + $0x38] sm:$0xff] %v290
  %307 = vst [vmem:[#allocation2 + $0x40] sm:$0xff] %v291
  %308 = vst [vmem:[#allocation2 + $0x48] sm:$0xff] %v292
  %309 = vst [vmem:[#allocation2 + $0x50] sm:$0xff] %v293
  %310 = vst [vmem:[#allocation2 + $0x58] sm:$0xff] %v294
  %311 = vst [vmem:[#allocation2 + $0x60] sm:$0xff] %v295
  %312 = vst [vmem:[#allocation2 + $0x68] sm:$0xff] %v296
  %313 = vst [vmem:[#allocation2 + $0x70] sm:$0xff] %v297
  %314 = vst [vmem:[#allocation2 + $0x78] sm:$0xff] %v298
  // Predicated region
  $region18: #{lightgcn_forward.3} parent=0 // pred_check
    %p315 = pneg %p17
  $region19: #{lightgcn_forward.3} parent=0 // pred_check_branch
    %317 = sbr.rel (%p315) target = $region21
  $region20: #{lightgcn_forward.3} parent=0 // pred_region
    %v318 = vld [vmem:[#allocation2] sm:$0xff]
    %v319 = vld [vmem:[#allocation2 + $0x8] sm:$0xff]
    %v320 = vld [vmem:[#allocation2 + $0x10] sm:$0xff]
    %v321 = vld [vmem:[#allocation2 + $0x18] sm:$0xff]
    %v322 = vld [vmem:[#allocation2 + $0x20] sm:$0xff]
    %v323 = vld [vmem:[#allocation2 + $0x28] sm:$0xff]
    %v324 = vld [vmem:[#allocation2 + $0x30] sm:$0xff]
    %v325 = vld [vmem:[#allocation2 + $0x38] sm:$0xff]
    %v326 = vld [vmem:[#allocation2 + $0x40] sm:$0xff]
    %v327 = vld [vmem:[#allocation2 + $0x48] sm:$0xff]
    %v328 = vld [vmem:[#allocation2 + $0x50] sm:$0xff]
    %v329 = vld [vmem:[#allocation2 + $0x58] sm:$0xff]
    %v330 = vld [vmem:[#allocation2 + $0x60] sm:$0xff]
    %v331 = vld [vmem:[#allocation2 + $0x68] sm:$0xff]
    %v332 = vld [vmem:[#allocation2 + $0x70] sm:$0xff]
    %v333 = vld [vmem:[#allocation2 + $0x78] sm:$0xff]
    %v334 = vpack.c.bf16 %v319, %v318
    %v335 = vpack.c.bf16 %v321, %v320
    %v336 = vpack.c.bf16 %v323, %v322
    %v337 = vpack.c.bf16 %v325, %v324
    %v338 = vpack.c.bf16 %v327, %v326
    %v339 = vpack.c.bf16 %v329, %v328
    %v340 = vpack.c.bf16 %v331, %v330
    %v341 = vpack.c.bf16 %v333, %v332
    %v350 = vunpack.c.l.b16 %v334
    %v351 = vunpack.c.h.b16 %v334
    %v352 = vunpack.c.l.b16 %v335
    %v353 = vunpack.c.h.b16 %v335
    %v354 = vunpack.c.l.b16 %v336
    %v355 = vunpack.c.h.b16 %v336
    %v356 = vunpack.c.l.b16 %v337
    %v357 = vunpack.c.h.b16 %v337
    %v358 = vunpack.c.l.b16 %v338
    %v359 = vunpack.c.h.b16 %v338
    %v360 = vunpack.c.l.b16 %v339
    %v361 = vunpack.c.h.b16 %v339
    %v362 = vunpack.c.l.b16 %v340
    %v363 = vunpack.c.h.b16 %v340
    %v364 = vunpack.c.l.b16 %v341
    %v365 = vunpack.c.h.b16 %v341
    %v366 = vpack.c.b16 %v350, %v350
    %v367 = vpack.c.b16 %v351, %v351
    %v368 = vpack.c.b16 %v352, %v352
    %v369 = vpack.c.b16 %v353, %v353
    %v370 = vpack.c.b16 %v354, %v354
    %v371 = vpack.c.b16 %v355, %v355
    %v372 = vpack.c.b16 %v356, %v356
    %v373 = vpack.c.b16 %v357, %v357
    %v374 = vpack.c.b16 %v358, %v358
    %v375 = vpack.c.b16 %v359, %v359
    %v376 = vpack.c.b16 %v360, %v360
    %v377 = vpack.c.b16 %v361, %v361
    %v378 = vpack.c.b16 %v362, %v362
    %v379 = vpack.c.b16 %v363, %v363
    %v380 = vpack.c.b16 %v364, %v364
    %v381 = vpack.c.b16 %v365, %v365
    %398 = vst [vmem:[%s3] sm:$0xf] %v366
    %399 = vst [vmem:[%s3 + $0x4] sm:$0xf] %v367
    %400 = vst [vmem:[%s3 + $0x8] sm:$0xf] %v368
    %401 = vst [vmem:[%s3 + $0xc] sm:$0xf] %v369
    %402 = vst [vmem:[%s3 + $0x10] sm:$0xf] %v370
    %403 = vst [vmem:[%s3 + $0x14] sm:$0xf] %v371
    %404 = vst [vmem:[%s3 + $0x18] sm:$0xf] %v372
    %405 = vst [vmem:[%s3 + $0x1c] sm:$0xf] %v373
    %406 = vst [vmem:[%s3 + $0x20] sm:$0xf] %v374
    %407 = vst [vmem:[%s3 + $0x24] sm:$0xf] %v375
    %408 = vst [vmem:[%s3 + $0x28] sm:$0xf] %v376
    %409 = vst [vmem:[%s3 + $0x2c] sm:$0xf] %v377
    %410 = vst [vmem:[%s3 + $0x30] sm:$0xf] %v378
    %411 = vst [vmem:[%s3 + $0x34] sm:$0xf] %v379
    %412 = vst [vmem:[%s3 + $0x38] sm:$0xf] %v380
    %413 = vst [vmem:[%s3 + $0x3c] sm:$0xf] %v381
    %v414 = vld [vmem:[%s2] sm:$0xff]
    %v415 = vld [vmem:[%s2 + $0x8] sm:$0xff]
    %v416 = vld [vmem:[%s2 + $0x10] sm:$0xff]
    %v417 = vld [vmem:[%s2 + $0x18] sm:$0xff]
    %v418 = vld [vmem:[%s2 + $0x20] sm:$0xff]
    %v419 = vld [vmem:[%s2 + $0x28] sm:$0xff]
    %v420 = vld [vmem:[%s2 + $0x30] sm:$0xff]
    %v421 = vld [vmem:[%s2 + $0x38] sm:$0xff]
    %v422 = vld [vmem:[%s2 + $0x40] sm:$0xff]
    %v423 = vld [vmem:[%s2 + $0x48] sm:$0xff]
    %v424 = vld [vmem:[%s2 + $0x50] sm:$0xff]
    %v425 = vld [vmem:[%s2 + $0x58] sm:$0xff]
    %v426 = vld [vmem:[%s2 + $0x60] sm:$0xff]
    %v427 = vld [vmem:[%s2 + $0x68] sm:$0xff]
    %v428 = vld [vmem:[%s2 + $0x70] sm:$0xff]
    %v429 = vld [vmem:[%s2 + $0x78] sm:$0xff]
    %v430 = vld [vmem:[#allocation2] sm:$0xff]
    %v431 = vld [vmem:[#allocation2 + $0x8] sm:$0xff]
    %v432 = vld [vmem:[#allocation2 + $0x10] sm:$0xff]
    %v433 = vld [vmem:[#allocation2 + $0x18] sm:$0xff]
    %v434 = vld [vmem:[#allocation2 + $0x20] sm:$0xff]
    %v435 = vld [vmem:[#allocation2 + $0x28] sm:$0xff]
    %v436 = vld [vmem:[#allocation2 + $0x30] sm:$0xff]
    %v437 = vld [vmem:[#allocation2 + $0x38] sm:$0xff]
    %v438 = vld [vmem:[#allocation2 + $0x40] sm:$0xff]
    %v439 = vld [vmem:[#allocation2 + $0x48] sm:$0xff]
    %v440 = vld [vmem:[#allocation2 + $0x50] sm:$0xff]
    %v441 = vld [vmem:[#allocation2 + $0x58] sm:$0xff]
    %v442 = vld [vmem:[#allocation2 + $0x60] sm:$0xff]
    %v443 = vld [vmem:[#allocation2 + $0x68] sm:$0xff]
    %v444 = vld [vmem:[#allocation2 + $0x70] sm:$0xff]
    %v445 = vld [vmem:[#allocation2 + $0x78] sm:$0xff]
    %v446 = vadd.f32 %v414, %v430
    %v447 = vadd.f32 %v415, %v431
    %v448 = vadd.f32 %v416, %v432
    %v449 = vadd.f32 %v417, %v433
    %v450 = vadd.f32 %v418, %v434
    %v451 = vadd.f32 %v419, %v435
    %v452 = vadd.f32 %v420, %v436
    %v453 = vadd.f32 %v421, %v437
    %v454 = vadd.f32 %v422, %v438
    %v455 = vadd.f32 %v423, %v439
    %v456 = vadd.f32 %v424, %v440
    %v457 = vadd.f32 %v425, %v441
    %v458 = vadd.f32 %v426, %v442
    %v459 = vadd.f32 %v427, %v443
    %v460 = vadd.f32 %v428, %v444
    %v461 = vadd.f32 %v429, %v445
    %462 = vst [vmem:[%s4] sm:$0xff] %v446
    %463 = vst [vmem:[%s4 + $0x8] sm:$0xff] %v447
    %464 = vst [vmem:[%s4 + $0x10] sm:$0xff] %v448
    %465 = vst [vmem:[%s4 + $0x18] sm:$0xff] %v449
    %466 = vst [vmem:[%s4 + $0x20] sm:$0xff] %v450
    %467 = vst [vmem:[%s4 + $0x28] sm:$0xff] %v451
    %468 = vst [vmem:[%s4 + $0x30] sm:$0xff] %v452
    %469 = vst [vmem:[%s4 + $0x38] sm:$0xff] %v453
    %470 = vst [vmem:[%s4 + $0x40] sm:$0xff] %v454
    %471 = vst [vmem:[%s4 + $0x48] sm:$0xff] %v455
    %472 = vst [vmem:[%s4 + $0x50] sm:$0xff] %v456
    %473 = vst [vmem:[%s4 + $0x58] sm:$0xff] %v457
    %474 = vst [vmem:[%s4 + $0x60] sm:$0xff] %v458
    %475 = vst [vmem:[%s4 + $0x68] sm:$0xff] %v459
    %476 = vst [vmem:[%s4 + $0x70] sm:$0xff] %v460
    %477 = vst [vmem:[%s4 + $0x78] sm:$0xff] %v461
  $region21: #{lightgcn_forward.3} parent=0 // pred_fallthru
    _
  // Predicated region
  $region22: #{lightgcn_forward.3} parent=0 // pred_check
    _
  $region23: #{lightgcn_forward.3} parent=0 // pred_check_branch
    %479 = sbr.rel (0) target = $region25
  $region24: #{lightgcn_forward.3} parent=0 // pred_region
    _
  $region25: #{lightgcn_forward.3} parent=0 // pred_fallthru
    _
  // Predicated region
  $region26: #{lightgcn_forward.3} parent=0 // pred_check
    _
  $region27: #{lightgcn_forward.3} parent=0 // pred_check_branch
    %481 = sbr.rel (0) target = $region29
  $region28: #{lightgcn_forward.3} parent=0 // pred_region
    _
  $region29: #{lightgcn_forward.3} parent=0 // pred_fallthru
    _
  // Predicated region
  $region30: #{lightgcn_forward.3} parent=0 // pred_check
    _
  $region31: #{lightgcn_forward.3} parent=0 // pred_check_branch
    %483 = sbr.rel (0) target = $region33
  $region32: #{lightgcn_forward.3} parent=0 // pred_region
    _
  $region33: #{lightgcn_forward.3} parent=0 // pred_fallthru
    _
  // Predicated region
  $region34: #{lightgcn_forward.3} parent=0 // pred_check
    _
  $region35: #{lightgcn_forward.3} parent=0 // pred_check_branch
    %485 = sbr.rel (0) target = $region37
  $region36: #{lightgcn_forward.3} parent=0 // pred_region
    _
  $region37: #{lightgcn_forward.3} parent=0 // pred_fallthru
    _

// kernel: lightgcn_forward.5
$region0: #{lightgcn_forward.5}
  #allocation0 [shape = 'u32[]', space=smem, size = 0x4, offset = 0x4, fixed_abs, tag = 'smem constant byte address 0x4 - core index']
  #allocation1 [shape = 'u32[144,128]{1,0:T(1,128)}', space=vmem, size = 0x12000, scoped, tag = 'internal scratch']
  #allocation2 [shape = 'f32[128,128]{1,0:T(8,128)}', space=vmem, size = 0x10000, scoped, tag = 'scratch operand']
  %s0 = inlined_call_operand.vmem [shape: bf16[128,128], index: 0, kind: input, shape index: {}]
  %s1 = inlined_call_operand.vmem [shape: bf16[128,128], index: 1, kind: input, shape index: {}]
  %s2 = inlined_call_operand.vmem [shape: f32[128,128], index: 2, kind: input, shape index: {}, may-alias: {2,4}]
  %s3 = inlined_call_operand.hbm [shape: bf16[128,128], index: 3, kind: output, shape index: {0}]
  %s4 = inlined_call_operand.vmem [shape: f32[128,128], index: 4, kind: output, shape index: {1}, may-alias: {2,4}]
  %5 = xla_tuple %s3, %s4
  %s6 = sld [smem:[#allocation0]]
  $region38: #{lightgcn_forward.5} parent=0
    _
  %s8 = ssub.s32 1, %s6
  %s9 = scalar_select 0, %s8, %s6
  $region1: #{lightgcn_forward.5} parent=0
    #allocation3 [shape = 'u8[32768]{0}', space=vmem, size = 0x8000, scoped, tag = 'output window, operand 0, single buffered']
    #allocation4 [shape = 's32[1]{0}', space=sflag, size = 0x4, scoped, tag = 'scoped memory for lightgcn_forward.5']
    %10 = vsyncpa [#allocation4], 0
    // Predicated region
    $region2: #{lightgcn_forward.5} parent=1 // pred_check
      _
    $region3: #{lightgcn_forward.5} parent=1 // pred_check_branch
      %12 = sbr.rel (0) target = $region5
    $region4: #{lightgcn_forward.5} parent=1 // pred_region
      _
    $region5: #{lightgcn_forward.5} parent=1 // pred_fallthru
      _
    // Predicated region
    $region6: #{lightgcn_forward.5} parent=1 // pred_check
      _
    $region7: #{lightgcn_forward.5} parent=1 // pred_check_branch
      %14 = sbr.rel (0) target = $region9
    $region8: #{lightgcn_forward.5} parent=1 // pred_region
      _
    $region9: #{lightgcn_forward.5} parent=1 // pred_fallthru
      _
    // Predicated region
    $region10: #{lightgcn_forward.5} parent=1 // pred_check
      _
    $region11: #{lightgcn_forward.5} parent=1 // pred_check_branch
      %16 = sbr.rel (0) target = $region13
    $region12: #{lightgcn_forward.5} parent=1 // pred_region
      _
    $region13: #{lightgcn_forward.5} parent=1 // pred_fallthru
      _
    %p18 = scmp.eq.s32.totalorder 0, 0
    // Predicated region
    $region14: #{lightgcn_forward.5} parent=1 // pred_check
      %p19 = pneg %p18
    $region15: #{lightgcn_forward.5} parent=1 // pred_check_branch
      %21 = sbr.rel (%p19) target = $region17
    $region16: #{lightgcn_forward.5} parent=1 // pred_region
      %22 = vst [vmem:[#allocation2] sm:$0xff] 0.0
      %23 = vst [vmem:[#allocation2 + $0x8] sm:$0xff] 0.0
      %24 = vst [vmem:[#allocation2 + $0x10] sm:$0xff] 0.0
      %25 = vst [vmem:[#allocation2 + $0x18] sm:$0xff] 0.0
      %26 = vst [vmem:[#allocation2 + $0x20] sm:$0xff] 0.0
      %27 = vst [vmem:[#allocation2 + $0x28] sm:$0xff] 0.0
      %28 = vst [vmem:[#allocation2 + $0x30] sm:$0xff] 0.0
      %29 = vst [vmem:[#allocation2 + $0x38] sm:$0xff] 0.0
      %30 = vst [vmem:[#allocation2 + $0x40] sm:$0xff] 0.0
      %31 = vst [vmem:[#allocation2 + $0x48] sm:$0xff] 0.0
      %32 = vst [vmem:[#allocation2 + $0x50] sm:$0xff] 0.0
      %33 = vst [vmem:[#allocation2 + $0x58] sm:$0xff] 0.0
      %34 = vst [vmem:[#allocation2 + $0x60] sm:$0xff] 0.0
      %35 = vst [vmem:[#allocation2 + $0x68] sm:$0xff] 0.0
      %36 = vst [vmem:[#allocation2 + $0x70] sm:$0xff] 0.0
      %37 = vst [vmem:[#allocation2 + $0x78] sm:$0xff] 0.0
    $region17: #{lightgcn_forward.5} parent=1 // pred_fallthru
      _
    %s38 = smul.u32 0, 128
    %s39 = sshra.s32 %s38, 3
    %s40 = sand.u32 %s38, 7
    %s41 = smul.addr %s39, 4
    %s42 = scalar_lea.vmem %s1, %s41
    %v43 = vld [vmem:[%s42] sm:$0xf]
    %v44 = vld [vmem:[%s42 + $0x4] sm:$0xf]
    %v45 = vld [vmem:[%s42 + $0x8] sm:$0xf]
    %v46 = vld [vmem:[%s42 + $0xc] sm:$0xf]
    %v47 = vld [vmem:[%s42 + $0x10] sm:$0xf]
    %v48 = vld [vmem:[%s42 + $0x14] sm:$0xf]
    %v49 = vld [vmem:[%s42 + $0x18] sm:$0xf]
    %v50 = vld [vmem:[%s42 + $0x1c] sm:$0xf]
    %v51 = vld [vmem:[%s42 + $0x20] sm:$0xf]
    %v52 = vld [vmem:[%s42 + $0x24] sm:$0xf]
    %v53 = vld [vmem:[%s42 + $0x28] sm:$0xf]
    %v54 = vld [vmem:[%s42 + $0x2c] sm:$0xf]
    %v55 = vld [vmem:[%s42 + $0x30] sm:$0xf]
    %v56 = vld [vmem:[%s42 + $0x34] sm:$0xf]
    %v57 = vld [vmem:[%s42 + $0x38] sm:$0xf]
    %v58 = vld [vmem:[%s42 + $0x3c] sm:$0xf]
    %v59 = vld [vmem:[#allocation2] sm:$0xff]
    %v60 = vld [vmem:[#allocation2 + $0x8] sm:$0xff]
    %v61 = vld [vmem:[#allocation2 + $0x10] sm:$0xff]
    %v62 = vld [vmem:[#allocation2 + $0x18] sm:$0xff]
    %v63 = vld [vmem:[#allocation2 + $0x20] sm:$0xff]
    %v64 = vld [vmem:[#allocation2 + $0x28] sm:$0xff]
    %v65 = vld [vmem:[#allocation2 + $0x30] sm:$0xff]
    %v66 = vld [vmem:[#allocation2 + $0x38] sm:$0xff]
    %v67 = vld [vmem:[#allocation2 + $0x40] sm:$0xff]
    %v68 = vld [vmem:[#allocation2 + $0x48] sm:$0xff]
    %v69 = vld [vmem:[#allocation2 + $0x50] sm:$0xff]
    %v70 = vld [vmem:[#allocation2 + $0x58] sm:$0xff]
    %v71 = vld [vmem:[#allocation2 + $0x60] sm:$0xff]
    %v72 = vld [vmem:[#allocation2 + $0x68] sm:$0xff]
    %v73 = vld [vmem:[#allocation2 + $0x70] sm:$0xff]
    %v74 = vld [vmem:[#allocation2 + $0x78] sm:$0xff]
    %v75 = vld [vmem:[%s0] sm:$0xf]
    %v76 = vld [vmem:[%s0 + $0x4] sm:$0xf]
    %v77 = vld [vmem:[%s0 + $0x8] sm:$0xf]
    %v78 = vld [vmem:[%s0 + $0xc] sm:$0xf]
    %v79 = vld [vmem:[%s0 + $0x10] sm:$0xf]
    %v80 = vld [vmem:[%s0 + $0x14] sm:$0xf]
    %v81 = vld [vmem:[%s0 + $0x18] sm:$0xf]
    %v82 = vld [vmem:[%s0 + $0x1c] sm:$0xf]
    %v83 = vld [vmem:[%s0 + $0x20] sm:$0xf]
    %v84 = vld [vmem:[%s0 + $0x24] sm:$0xf]
    %v85 = vld [vmem:[%s0 + $0x28] sm:$0xf]
    %v86 = vld [vmem:[%s0 + $0x2c] sm:$0xf]
    %v87 = vld [vmem:[%s0 + $0x30] sm:$0xf]
    %v88 = vld [vmem:[%s0 + $0x34] sm:$0xf]
    %v89 = vld [vmem:[%s0 + $0x38] sm:$0xf]
    %v90 = vld [vmem:[%s0 + $0x3c] sm:$0xf]
    %v107 = vunpack.c.l.b16 %v75
    %v108 = vunpack.c.l.b16 %v76
    %v109 = vunpack.c.l.b16 %v77
    %v110 = vunpack.c.l.b16 %v78
    %v111 = vunpack.c.l.b16 %v79
    %v112 = vunpack.c.l.b16 %v80
    %v113 = vunpack.c.l.b16 %v81
    %v114 = vunpack.c.l.b16 %v82
    %v115 = vunpack.c.l.b16 %v83
    %v116 = vunpack.c.l.b16 %v84
    %v117 = vunpack.c.l.b16 %v85
    %v118 = vunpack.c.l.b16 %v86
    %v119 = vunpack.c.l.b16 %v87
    %v120 = vunpack.c.l.b16 %v88
    %v121 = vunpack.c.l.b16 %v89
    %v122 = vunpack.c.l.b16 %v90
    %v123 = vpack.c.b16 %v108, %v107
    %v124 = vpack.c.b16 %v110, %v109
    %v125 = vpack.c.b16 %v112, %v111
    %v126 = vpack.c.b16 %v114, %v113
    %v127 = vpack.c.b16 %v116, %v115
    %v128 = vpack.c.b16 %v118, %v117
    %v129 = vpack.c.b16 %v120, %v119
    %v130 = vpack.c.b16 %v122, %v121
    %v155 = vunpack.c.l.b16 %v43
    %v156 = vunpack.c.l.b16 %v44
    %v157 = vunpack.c.l.b16 %v45
    %v158 = vunpack.c.l.b16 %v46
    %v159 = vunpack.c.l.b16 %v47
    %v160 = vunpack.c.l.b16 %v48
    %v161 = vunpack.c.l.b16 %v49
    %v162 = vunpack.c.l.b16 %v50
    %v163 = vunpack.c.l.b16 %v51
    %v164 = vunpack.c.l.b16 %v52
    %v165 = vunpack.c.l.b16 %v53
    %v166 = vunpack.c.l.b16 %v54
    %v167 = vunpack.c.l.b16 %v55
    %v168 = vunpack.c.l.b16 %v56
    %v169 = vunpack.c.l.b16 %v57
    %v170 = vunpack.c.l.b16 %v58
    %v171 = vpack.c.b16 %v156, %v155
    %v172 = vpack.c.b16 %v158, %v157
    %v173 = vpack.c.b16 %v160, %v159
    %v174 = vpack.c.b16 %v162, %v161
    %v175 = vpack.c.b16 %v164, %v163
    %v176 = vpack.c.b16 %v166, %v165
    %v177 = vpack.c.b16 %v168, %v167
    %v178 = vpack.c.b16 %v170, %v169
    %187 = vmatprep.subr.bf16.mxu0 0
    %188 = vmatpush1.bf16.msra.mxu0 %v171
    %189 = vmatprep.subr.bf16.mxu0 0
    %190 = vmatpush1.bf16.msra.mxu0 %v172
    %191 = vmatprep.subr.bf16.mxu0 0
    %192 = vmatpush1.bf16.msra.mxu0 %v173
    %193 = vmatprep.subr.bf16.mxu0 0
    %194 = vmatpush1.bf16.msra.mxu0 %v174
    %195 = vmatprep.subr.bf16.mxu0 0
    %196 = vmatpush1.bf16.msra.mxu0 %v175
    %197 = vmatprep.subr.bf16.mxu0 0
    %198 = vmatpush1.bf16.msra.mxu0 %v176
    %199 = vmatprep.subr.bf16.mxu0 0
    %200 = vmatpush1.bf16.msra.mxu0 %v177
    %201 = vmatprep.subr.bf16.mxu0 0
    %202 = vmatpush1.bf16.msra.mxu0 %v178
    %203 = vmatprep.subr.bf16.mxu0 0
    %204 = vmatpush1.bf16.msra.mxu0 0
    %205 = vmatprep.subr.bf16.mxu0 0
    %206 = vmatpush1.bf16.msra.mxu0 0
    %207 = vmatprep.subr.bf16.mxu0 0
    %208 = vmatpush1.bf16.msra.mxu0 0
    %209 = vmatprep.subr.bf16.mxu0 0
    %210 = vmatpush1.bf16.msra.mxu0 0
    %211 = vmatprep.subr.bf16.mxu0 0
    %212 = vmatpush1.bf16.msra.mxu0 0
    %213 = vmatprep.subr.bf16.mxu0 0
    %214 = vmatpush1.bf16.msra.mxu0 0
    %215 = vmatprep.subr.bf16.mxu0 0
    %216 = vmatpush1.bf16.msra.mxu0 0
    %217 = vmatprep.subr.bf16.mxu0 0
    %218 = vmatpush1.bf16.msra.mxu0 0
    %219 = vmatprep.mubr.bf16.mxu0 0
    %220 = vmatmul.mubr.bf16.gmra.mrb[0].mxu0 %v123
    %v221 = vpop.f32.mrb[0].mxu0
    %v222 = vadd.f32 0.0, %v221
    %v223 = vpop.f32.mrb[0].mxu0
    %v224 = vpop.f32.mrb[0].mxu0
    %v225 = vadd.f32 0.0, %v224
    %v226 = vpop.f32.mrb[0].mxu0
    %227 = vmatprep.mubr.bf16.mxu0 0
    %228 = vmatmul.mubr.bf16.gmra.mrb[0].mxu0 %v124
    %v229 = vpop.f32.mrb[0].mxu0
    %v230 = vadd.f32 0.0, %v229
    %v231 = vpop.f32.mrb[0].mxu0
    %v232 = vpop.f32.mrb[0].mxu0
    %v233 = vadd.f32 0.0, %v232
    %v234 = vpop.f32.mrb[0].mxu0
    %235 = vmatprep.mubr.bf16.mxu0 0
    %236 = vmatmul.mubr.bf16.gmra.mrb[0].mxu0 %v125
    %v237 = vpop.f32.mrb[0].mxu0
    %v238 = vadd.f32 0.0, %v237
    %v239 = vpop.f32.mrb[0].mxu0
    %v240 = vpop.f32.mrb[0].mxu0
    %v241 = vadd.f32 0.0, %v240
    %v242 = vpop.f32.mrb[0].mxu0
    %243 = vmatprep.mubr.bf16.mxu0 0
    %244 = vmatmul.mubr.bf16.gmra.mrb[0].mxu0 %v126
    %v245 = vpop.f32.mrb[0].mxu0
    %v246 = vadd.f32 0.0, %v245
    %v247 = vpop.f32.mrb[0].mxu0
    %v248 = vpop.f32.mrb[0].mxu0
    %v249 = vadd.f32 0.0, %v248
    %v250 = vpop.f32.mrb[0].mxu0
    %251 = vmatprep.mubr.bf16.mxu0 0
    %252 = vmatmul.mubr.bf16.gmra.mrb[0].mxu0 %v127
    %v253 = vpop.f32.mrb[0].mxu0
    %v254 = vadd.f32 0.0, %v253
    %v255 = vpop.f32.mrb[0].mxu0
    %v256 = vpop.f32.mrb[0].mxu0
    %v257 = vadd.f32 0.0, %v256
    %v258 = vpop.f32.mrb[0].mxu0
    %259 = vmatprep.mubr.bf16.mxu0 0
    %260 = vmatmul.mubr.bf16.gmra.mrb[0].mxu0 %v128
    %v261 = vpop.f32.mrb[0].mxu0
    %v262 = vadd.f32 0.0, %v261
    %v263 = vpop.f32.mrb[0].mxu0
    %v264 = vpop.f32.mrb[0].mxu0
    %v265 = vadd.f32 0.0, %v264
    %v266 = vpop.f32.mrb[0].mxu0
    %267 = vmatprep.mubr.bf16.mxu0 0
    %268 = vmatmul.mubr.bf16.gmra.mrb[0].mxu0 %v129
    %v269 = vpop.f32.mrb[0].mxu0
    %v270 = vadd.f32 0.0, %v269
    %v271 = vpop.f32.mrb[0].mxu0
    %v272 = vpop.f32.mrb[0].mxu0
    %v273 = vadd.f32 0.0, %v272
    %v274 = vpop.f32.mrb[0].mxu0
    %275 = vmatprep.mubr.bf16.mxu0 0
    %276 = vmatmul.mubr.bf16.gmra.mrb[0].mxu0 %v130
    %v277 = vpop.f32.mrb[0].mxu0
    %v278 = vadd.f32 0.0, %v277
    %v279 = vpop.f32.mrb[0].mxu0
    %v280 = vpop.f32.mrb[0].mxu0
    %v281 = vadd.f32 0.0, %v280
    %v282 = vpop.f32.mrb[0].mxu0
    %283 = vdwg.mxu0
    %v284 = vadd.f32 %v59, %v222
    %v285 = vadd.f32 %v60, %v225
    %v286 = vadd.f32 %v61, %v230
    %v287 = vadd.f32 %v62, %v233
    %v288 = vadd.f32 %v63, %v238
    %v289 = vadd.f32 %v64, %v241
    %v290 = vadd.f32 %v65, %v246
    %v291 = vadd.f32 %v66, %v249
    %v292 = vadd.f32 %v67, %v254
    %v293 = vadd.f32 %v68, %v257
    %v294 = vadd.f32 %v69, %v262
    %v295 = vadd.f32 %v70, %v265
    %v296 = vadd.f32 %v71, %v270
    %v297 = vadd.f32 %v72, %v273
    %v298 = vadd.f32 %v73, %v278
    %v299 = vadd.f32 %v74, %v281
    %300 = vst [vmem:[#allocation2] sm:$0xff] %v284
    %301 = vst [vmem:[#allocation2 + $0x8] sm:$0xff] %v285
    %302 = vst [vmem:[#allocation2 + $0x10] sm:$0xff] %v286
    %303 = vst [vmem:[#allocation2 + $0x18] sm:$0xff] %v287
    %304 = vst [vmem:[#allocation2 + $0x20] sm:$0xff] %v288
    %305 = vst [vmem:[#allocation2 + $0x28] sm:$0xff] %v289
    %306 = vst [vmem:[#allocation2 + $0x30] sm:$0xff] %v290
    %307 = vst [vmem:[#allocation2 + $0x38] sm:$0xff] %v291
    %308 = vst [vmem:[#allocation2 + $0x40] sm:$0xff] %v292
    %309 = vst [vmem:[#allocation2 + $0x48] sm:$0xff] %v293
    %310 = vst [vmem:[#allocation2 + $0x50] sm:$0xff] %v294
    %311 = vst [vmem:[#allocation2 + $0x58] sm:$0xff] %v295
    %312 = vst [vmem:[#allocation2 + $0x60] sm:$0xff] %v296
    %313 = vst [vmem:[#allocation2 + $0x68] sm:$0xff] %v297
    %314 = vst [vmem:[#allocation2 + $0x70] sm:$0xff] %v298
    %315 = vst [vmem:[#allocation2 + $0x78] sm:$0xff] %v299
    // Predicated region
    $region18: #{lightgcn_forward.5} parent=1 // pred_check
      %p316 = pneg %p18
    $region19: #{lightgcn_forward.5} parent=1 // pred_check_branch
      %318 = sbr.rel (%p316) target = $region21
    $region20: #{lightgcn_forward.5} parent=1 // pred_region
      %v319 = vld [vmem:[#allocation2] sm:$0xff]
      %v320 = vld [vmem:[#allocation2 + $0x8] sm:$0xff]
      %v321 = vld [vmem:[#allocation2 + $0x10] sm:$0xff]
      %v322 = vld [vmem:[#allocation2 + $0x18] sm:$0xff]
      %v323 = vld [vmem:[#allocation2 + $0x20] sm:$0xff]
      %v324 = vld [vmem:[#allocation2 + $0x28] sm:$0xff]
      %v325 = vld [vmem:[#allocation2 + $0x30] sm:$0xff]
      %v326 = vld [vmem:[#allocation2 + $0x38] sm:$0xff]
      %v327 = vld [vmem:[#allocation2 + $0x40] sm:$0xff]
      %v328 = vld [vmem:[#allocation2 + $0x48] sm:$0xff]
      %v329 = vld [vmem:[#allocation2 + $0x50] sm:$0xff]
      %v330 = vld [vmem:[#allocation2 + $0x58] sm:$0xff]
      %v331 = vld [vmem:[#allocation2 + $0x60] sm:$0xff]
      %v332 = vld [vmem:[#allocation2 + $0x68] sm:$0xff]
      %v333 = vld [vmem:[#allocation2 + $0x70] sm:$0xff]
      %v334 = vld [vmem:[#allocation2 + $0x78] sm:$0xff]
      %v335 = vpack.c.bf16 %v320, %v319
      %v336 = vpack.c.bf16 %v322, %v321
      %v337 = vpack.c.bf16 %v324, %v323
      %v338 = vpack.c.bf16 %v326, %v325
      %v339 = vpack.c.bf16 %v328, %v327
      %v340 = vpack.c.bf16 %v330, %v329
      %v341 = vpack.c.bf16 %v332, %v331
      %v342 = vpack.c.bf16 %v334, %v333
      %v351 = vunpack.c.l.b16 %v335
      %v352 = vunpack.c.h.b16 %v335
      %v353 = vunpack.c.l.b16 %v336
      %v354 = vunpack.c.h.b16 %v336
      %v355 = vunpack.c.l.b16 %v337
      %v356 = vunpack.c.h.b16 %v337
      %v357 = vunpack.c.l.b16 %v338
      %v358 = vunpack.c.h.b16 %v338
      %v359 = vunpack.c.l.b16 %v339
      %v360 = vunpack.c.h.b16 %v339
      %v361 = vunpack.c.l.b16 %v340
      %v362 = vunpack.c.h.b16 %v340
      %v363 = vunpack.c.l.b16 %v341
      %v364 = vunpack.c.h.b16 %v341
      %v365 = vunpack.c.l.b16 %v342
      %v366 = vunpack.c.h.b16 %v342
      %v367 = vpack.c.b16 %v351, %v351
      %v368 = vpack.c.b16 %v352, %v352
      %v369 = vpack.c.b16 %v353, %v353
      %v370 = vpack.c.b16 %v354, %v354
      %v371 = vpack.c.b16 %v355, %v355
      %v372 = vpack.c.b16 %v356, %v356
      %v373 = vpack.c.b16 %v357, %v357
      %v374 = vpack.c.b16 %v358, %v358
      %v375 = vpack.c.b16 %v359, %v359
      %v376 = vpack.c.b16 %v360, %v360
      %v377 = vpack.c.b16 %v361, %v361
      %v378 = vpack.c.b16 %v362, %v362
      %v379 = vpack.c.b16 %v363, %v363
      %v380 = vpack.c.b16 %v364, %v364
      %v381 = vpack.c.b16 %v365, %v365
      %v382 = vpack.c.b16 %v366, %v366
      %399 = vst [vmem:[#allocation3] sm:$0xf] %v367
      %400 = vst [vmem:[#allocation3 + $0x4] sm:$0xf] %v368
      %401 = vst [vmem:[#allocation3 + $0x8] sm:$0xf] %v369
      %402 = vst [vmem:[#allocation3 + $0xc] sm:$0xf] %v370
      %403 = vst [vmem:[#allocation3 + $0x10] sm:$0xf] %v371
      %404 = vst [vmem:[#allocation3 + $0x14] sm:$0xf] %v372
      %405 = vst [vmem:[#allocation3 + $0x18] sm:$0xf] %v373
      %406 = vst [vmem:[#allocation3 + $0x1c] sm:$0xf] %v374
      %407 = vst [vmem:[#allocation3 + $0x20] sm:$0xf] %v375
      %408 = vst [vmem:[#allocation3 + $0x24] sm:$0xf] %v376
      %409 = vst [vmem:[#allocation3 + $0x28] sm:$0xf] %v377
      %410 = vst [vmem:[#allocation3 + $0x2c] sm:$0xf] %v378
      %411 = vst [vmem:[#allocation3 + $0x30] sm:$0xf] %v379
      %412 = vst [vmem:[#allocation3 + $0x34] sm:$0xf] %v380
      %413 = vst [vmem:[#allocation3 + $0x38] sm:$0xf] %v381
      %414 = vst [vmem:[#allocation3 + $0x3c] sm:$0xf] %v382
      %v415 = vld [vmem:[%s2] sm:$0xff]
      %v416 = vld [vmem:[%s2 + $0x8] sm:$0xff]
      %v417 = vld [vmem:[%s2 + $0x10] sm:$0xff]
      %v418 = vld [vmem:[%s2 + $0x18] sm:$0xff]
      %v419 = vld [vmem:[%s2 + $0x20] sm:$0xff]
      %v420 = vld [vmem:[%s2 + $0x28] sm:$0xff]
      %v421 = vld [vmem:[%s2 + $0x30] sm:$0xff]
      %v422 = vld [vmem:[%s2 + $0x38] sm:$0xff]
      %v423 = vld [vmem:[%s2 + $0x40] sm:$0xff]
      %v424 = vld [vmem:[%s2 + $0x48] sm:$0xff]
      %v425 = vld [vmem:[%s2 + $0x50] sm:$0xff]
      %v426 = vld [vmem:[%s2 + $0x58] sm:$0xff]
      %v427 = vld [vmem:[%s2 + $0x60] sm:$0xff]
      %v428 = vld [vmem:[%s2 + $0x68] sm:$0xff]
      %v429 = vld [vmem:[%s2 + $0x70] sm:$0xff]
      %v430 = vld [vmem:[%s2 + $0x78] sm:$0xff]
      %v431 = vld [vmem:[#allocation2] sm:$0xff]
      %v432 = vld [vmem:[#allocation2 + $0x8] sm:$0xff]
      %v433 = vld [vmem:[#allocation2 + $0x10] sm:$0xff]
      %v434 = vld [vmem:[#allocation2 + $0x18] sm:$0xff]
      %v435 = vld [vmem:[#allocation2 + $0x20] sm:$0xff]
      %v436 = vld [vmem:[#allocation2 + $0x28] sm:$0xff]
      %v437 = vld [vmem:[#allocation2 + $0x30] sm:$0xff]
      %v438 = vld [vmem:[#allocation2 + $0x38] sm:$0xff]
      %v439 = vld [vmem:[#allocation2 + $0x40] sm:$0xff]
      %v440 = vld [vmem:[#allocation2 + $0x48] sm:$0xff]
      %v441 = vld [vmem:[#allocation2 + $0x50] sm:$0xff]
      %v442 = vld [vmem:[#allocation2 + $0x58] sm:$0xff]
      %v443 = vld [vmem:[#allocation2 + $0x60] sm:$0xff]
      %v444 = vld [vmem:[#allocation2 + $0x68] sm:$0xff]
      %v445 = vld [vmem:[#allocation2 + $0x70] sm:$0xff]
      %v446 = vld [vmem:[#allocation2 + $0x78] sm:$0xff]
      %v447 = vadd.f32 %v415, %v431
      %v448 = vadd.f32 %v416, %v432
      %v449 = vadd.f32 %v417, %v433
      %v450 = vadd.f32 %v418, %v434
      %v451 = vadd.f32 %v419, %v435
      %v452 = vadd.f32 %v420, %v436
      %v453 = vadd.f32 %v421, %v437
      %v454 = vadd.f32 %v422, %v438
      %v455 = vadd.f32 %v423, %v439
      %v456 = vadd.f32 %v424, %v440
      %v457 = vadd.f32 %v425, %v441
      %v458 = vadd.f32 %v426, %v442
      %v459 = vadd.f32 %v427, %v443
      %v460 = vadd.f32 %v428, %v444
      %v461 = vadd.f32 %v429, %v445
      %v462 = vadd.f32 %v430, %v446
      %463 = vst [vmem:[%s4] sm:$0xff] %v447
      %464 = vst [vmem:[%s4 + $0x8] sm:$0xff] %v448
      %465 = vst [vmem:[%s4 + $0x10] sm:$0xff] %v449
      %466 = vst [vmem:[%s4 + $0x18] sm:$0xff] %v450
      %467 = vst [vmem:[%s4 + $0x20] sm:$0xff] %v451
      %468 = vst [vmem:[%s4 + $0x28] sm:$0xff] %v452
      %469 = vst [vmem:[%s4 + $0x30] sm:$0xff] %v453
      %470 = vst [vmem:[%s4 + $0x38] sm:$0xff] %v454
      %471 = vst [vmem:[%s4 + $0x40] sm:$0xff] %v455
      %472 = vst [vmem:[%s4 + $0x48] sm:$0xff] %v456
      %473 = vst [vmem:[%s4 + $0x50] sm:$0xff] %v457
      %474 = vst [vmem:[%s4 + $0x58] sm:$0xff] %v458
      %475 = vst [vmem:[%s4 + $0x60] sm:$0xff] %v459
      %476 = vst [vmem:[%s4 + $0x68] sm:$0xff] %v460
      %477 = vst [vmem:[%s4 + $0x70] sm:$0xff] %v461
      %478 = vst [vmem:[%s4 + $0x78] sm:$0xff] %v462
    $region21: #{lightgcn_forward.5} parent=1 // pred_fallthru
      _
    // Predicated region
    $region22: #{lightgcn_forward.5} parent=1 // pred_check
      _
    $region23: #{lightgcn_forward.5} parent=1 // pred_check_branch
      %480 = sbr.rel (0) target = $region25
    $region24: #{lightgcn_forward.5} parent=1 // pred_region
      %s482 = ssub.s32 1024, 1024
      %483 = vsyncadd [#allocation4], %s482
      %s484 = sshll.u32 [#allocation3], 4
      %s485 = int_to_ptr.vmem [resolvable:$true] %s484
      %490 = dma.vmem_to_hbm [thread:$0]  %s485, 1024, %s3, [#allocation4], 64, 64, 4
    $region25: #{lightgcn_forward.5} parent=1 // pred_fallthru
      _
    // Predicated region
    $region26: #{lightgcn_forward.5} parent=1 // pred_check
      _
    $region27: #{lightgcn_forward.5} parent=1 // pred_check_branch
      %492 = sbr.rel (0) target = $region29
    $region28: #{lightgcn_forward.5} parent=1 // pred_region
      _
    $region29: #{lightgcn_forward.5} parent=1 // pred_fallthru
      _
    // Predicated region
    $region30: #{lightgcn_forward.5} parent=1 // pred_check
      _
    $region31: #{lightgcn_forward.5} parent=1 // pred_check_branch
      %494 = sbr.rel (0) target = $region33
    $region32: #{lightgcn_forward.5} parent=1 // pred_region
      %495 = dma.done [#allocation4], 1024
    $region33: #{lightgcn_forward.5} parent=1 // pred_fallthru
      _
    // Predicated region
    $region34: #{lightgcn_forward.5} parent=1 // pred_check
      _
    $region35: #{lightgcn_forward.5} parent=1 // pred_check_branch
      %497 = sbr.rel (0) target = $region37
    $region36: #{lightgcn_forward.5} parent=1 // pred_region
      _
    $region37: #{lightgcn_forward.5} parent=1 // pred_fallthru
      _
    %498 = vsyncpa [#allocation4], 1

</llo_original>
